<compile_context>
chip_gen: v6e
topology: v6e:2x2x1
jax: 0.10.0
libtpu: 0.0.40
codegen_flags: <defaults>
</compile_context>

<pallas_src>
import functools

import jax
import jax.numpy as jnp
from jax.experimental import pallas as pl
from jax.experimental.pallas import tpu as pltpu

_LANE = 128
_SUBLANE = 8
_BLOCK_ROWS = 2048  # 2048 x 128 x 4B = 1 MiB f32 per block


def _round_up(n, m):
    return ((n + m - 1) // m) * m


def _mix32(h):
    # "lowbias32" finalizer (Wellons) — good avalanche on sequential counters.
    h = h ^ (h >> 16)
    h = h * jnp.uint32(0x7FEB352D)
    h = h ^ (h >> 15)
    h = h * jnp.uint32(0x846CA68B)
    h = h ^ (h >> 16)
    return h


def _ndtri(p):
    """Acklam's rational approximation of the inverse standard-normal CDF.

    Accurate to ~1.15e-9 relative error; uses only mul/add/div/log/sqrt/select.
    """
    a1, a2, a3 = -3.969683028665376e+01, 2.209460984245205e+02, -2.759285104469687e+02
    a4, a5, a6 = 1.383577518672690e+02, -3.066479806614716e+01, 2.506628277459239e+00
    b1, b2, b3 = -5.447609879822406e+01, 1.615858368580409e+02, -1.556989798598866e+02
    b4, b5 = 6.680131188771972e+01, -1.328068155288572e+01
    c1, c2, c3 = -7.784894002430293e-03, -3.223964580411365e-01, -2.400758277161838e+00
    c4, c5, c6 = -2.549732539343734e+00, 4.374664141464968e+00, 2.938163982698783e+00
    d1, d2, d3 = 7.784695709041462e-03, 3.224671290700398e-01, 2.445134137142996e+00
    d4 = 3.754408661907416e+00
    p_low = 0.02425
    p_high = 1.0 - p_low

    # Central region.
    q = p - 0.5
    r = q * q
    num_c = (((((a1 * r + a2) * r + a3) * r + a4) * r + a5) * r + a6) * q
    den_c = ((((b1 * r + b2) * r + b3) * r + b4) * r + b5) * r + 1.0
    x_central = num_c / den_c

    # Lower tail (clamp log args so unselected lanes stay finite).
    p_l = jnp.minimum(p, p_low)
    q_l = jnp.sqrt(-2.0 * jnp.log(p_l))
    x_low = (((((c1 * q_l + c2) * q_l + c3) * q_l + c4) * q_l + c5) * q_l + c6) / \
            ((((d1 * q_l + d2) * q_l + d3) * q_l + d4) * q_l + 1.0)

    # Upper tail.
    p_h = jnp.minimum(1.0 - p, p_low)
    q_h = jnp.sqrt(-2.0 * jnp.log(p_h))
    x_high = -(((((c1 * q_h + c2) * q_h + c3) * q_h + c4) * q_h + c5) * q_h + c6) / \
             ((((d1 * q_h + d2) * q_h + d3) * q_h + d4) * q_h + 1.0)

    x = jnp.where(p < p_low, x_low, x_central)
    x = jnp.where(p > p_high, x_high, x)
    return x


def _gaussian_noise_kernel(seed_ref, x_ref, o_ref, *, sigma):
    rows, lanes = x_ref.shape          # static block shape, e.g. (2048, 128)
    pid = pl.program_id(0)

    # Single upcast of x, reused (feedback: avoid double casts / live copies).
    x = x_ref[...].astype(jnp.float32)

    # Unique per-element 32-bit counter: tile-independent streams by
    # construction (program_id folded in via the global row offset).
    row = jax.lax.broadcasted_iota(jnp.int32, (rows, lanes), 0)
    col = jax.lax.broadcasted_iota(jnp.int32, (rows, lanes), 1)
    ctr = ((pid * rows + row) * lanes + col).astype(jnp.uint32)
    key = seed_ref[0].astype(jnp.uint32) * jnp.uint32(0x9E3779B9)

    bits = _mix32(ctr ^ key)
    bits = _mix32(bits + jnp.uint32(0x9E3779B9))

    # Uniform in (0, 1): 24 high bits + half-ulp offset (never exactly 0 or 1).
    uf = (bits >> 8).astype(jnp.int32).astype(jnp.float32)
    u = (uf + 0.5) * (1.0 / 16777216.0)

    z = _ndtri(u)                      # standard normal samples

    o_ref[...] = (x * (1.0 + sigma * z)).astype(o_ref.dtype)


def gaussian_noise(x, seed, *, sigma=0.1, training=True):
    """Pallas implementation of GaussianNoise.forward.

    Args:
      x: input array (any shape, e.g. NCHW), float dtype.
      seed: int32 PRNG seed (stands in for torch's global RNG state).
      sigma: relative noise std.
      training: mirrors nn.Module.training.
    """
    if (not training) or sigma == 0:
        return x

    orig_shape = x.shape
    orig_dtype = x.dtype
    flat = x.reshape(-1)
    n = flat.shape[0]

    # Pad only to a lane multiple (128); the grid absorbs any ragged row block.
    n_pad = _round_up(n, _LANE)
    if n_pad != n:
        flat = jnp.pad(flat, (0, n_pad - n))
    rows = n_pad // _LANE
    x2d = flat.reshape(rows, _LANE)

    block_rows = min(_BLOCK_ROWS, _round_up(rows, _SUBLANE))
    grid = (pl.cdiv(rows, block_rows),)

    seed_arr = jnp.asarray([seed], dtype=jnp.int32)

    out2d = pl.pallas_call(
        functools.partial(_gaussian_noise_kernel, sigma=float(sigma)),
        out_shape=jax.ShapeDtypeStruct((rows, _LANE), orig_dtype),
        grid=grid,
        in_specs=[
            pl.BlockSpec(memory_space=pltpu.SMEM),                  # seed scalar
            pl.BlockSpec((block_rows, _LANE), lambda i: (i, 0)),    # x tile
        ],
        out_specs=pl.BlockSpec((block_rows, _LANE), lambda i: (i, 0)),
        input_output_aliases={1: 0},   # elementwise op: reuse x2d's buffer
        compiler_params=pltpu.CompilerParams(
            dimension_semantics=("parallel",)),
    )(seed_arr, x2d)

    out_flat = out2d.reshape(-1)
    if n_pad != n:
        out_flat = out_flat[:n]
    return out_flat.reshape(orig_shape)


if __name__ == "__main__":
    key = jax.random.PRNGKey(0)
    # Small NCHW input consistent with a conv-style feature map.
    x = jax.random.normal(key, (2, 4, 16, 16), dtype=jnp.float32)

    y = gaussian_noise(x, seed=42, sigma=0.1, training=True)
    y = jax.block_until_ready(y)

    # Shape / dtype preserved, finite values.
    assert y.shape == x.shape and y.dtype == x.dtype
    assert bool(jnp.all(jnp.isfinite(y)))

    # Eval mode and sigma == 0 are identity.
    assert bool(jnp.all(gaussian_noise(x, seed=42, sigma=0.1, training=False) == x))
    assert bool(jnp.all(gaussian_noise(x, seed=42, sigma=0.0, training=True) == x))

    # Recovered noise z = (y/x - 1)/sigma should look standard normal (loose bounds).
    z = (y / x - 1.0) / 0.1
    m = float(jnp.mean(z))
    s = float(jnp.std(z))
    assert abs(m) < 0.25 and 0.6 < s < 1.4, (m, s)

    print("KERNEL_OK")
</pallas_src>

<mosaic_0001>
module attributes {stable_mosaic.version = 11 : i64} {
  func.func @_gaussian_noise_kernel(%arg0: i32, %arg1: memref<1xi32, #tpu.memory_space<smem>>, %arg2: memref<16x128xf32, #tpu.memory_space<vmem>>, %arg3: memref<16x128xf32, #tpu.memory_space<vmem>>) attributes {dimension_semantics = [#tpu.dimension_semantics<parallel>], iteration_bounds = array<i64: 1>, scalar_prefetch = 0 : i64, scratch_operands = 0 : i64, tpu.core_type = #tpu.core_type<tc>, window_params = [{transform_indices = @transform_0, window_bounds = array<i64: 1>}, {transform_indices = @transform_1, window_bounds = array<i64: 16, 128>}, {transform_indices = @transform_2, window_bounds = array<i64: 16, 128>}]} {
    %c0 = arith.constant 0 : index
    %c0_0 = arith.constant 0 : index
    %0 = vector.load %arg2[%c0, %c0_0] : memref<16x128xf32, #tpu.memory_space<vmem>>, vector<16x128xf32>
    %1 = tpu.iota {dimensions = array<i32: 0>} : vector<16x128xi32>
    %2 = tpu.iota {dimensions = array<i32: 1>} : vector<16x128xi32>
    %c16_i32 = arith.constant 16 : i32
    %3 = arith.muli %arg0, %c16_i32 : i32
    %4 = vector.broadcast %3 : i32 to vector<16x128xi32>
    %5 = arith.addi %4, %1 : vector<16x128xi32>
    %c128_i32 = arith.constant 128 : i32
    %6 = vector.broadcast %c128_i32 : i32 to vector<16x128xi32>
    %7 = arith.muli %5, %6 : vector<16x128xi32>
    %8 = arith.addi %7, %2 : vector<16x128xi32>
    %c0_1 = arith.constant 0 : index
    %9 = memref.load %arg1[%c0_1] : memref<1xi32, #tpu.memory_space<smem>>
    %c-1640531527_i32 = arith.constant -1640531527 : i32
    %10 = arith.muli %9, %c-1640531527_i32 : i32
    %11 = vector.broadcast %10 : i32 to vector<16x128xi32>
    %12 = arith.xori %8, %11 : vector<16x128xi32>
    %c16_i32_2 = arith.constant 16 : i32
    %13 = vector.broadcast %c16_i32_2 : i32 to vector<16x128xi32>
    %14 = arith.shrui %12, %13 : vector<16x128xi32>
    %15 = arith.xori %12, %14 : vector<16x128xi32>
    %c2146121005_i32 = arith.constant 2146121005 : i32
    %16 = vector.broadcast %c2146121005_i32 : i32 to vector<16x128xi32>
    %17 = arith.muli %15, %16 : vector<16x128xi32>
    %c15_i32 = arith.constant 15 : i32
    %18 = vector.broadcast %c15_i32 : i32 to vector<16x128xi32>
    %19 = arith.shrui %17, %18 : vector<16x128xi32>
    %20 = arith.xori %17, %19 : vector<16x128xi32>
    %c-2073254261_i32 = arith.constant -2073254261 : i32
    %21 = vector.broadcast %c-2073254261_i32 : i32 to vector<16x128xi32>
    %22 = arith.muli %20, %21 : vector<16x128xi32>
    %c16_i32_3 = arith.constant 16 : i32
    %23 = vector.broadcast %c16_i32_3 : i32 to vector<16x128xi32>
    %24 = arith.shrui %22, %23 : vector<16x128xi32>
    %25 = arith.xori %22, %24 : vector<16x128xi32>
    %c-1640531527_i32_4 = arith.constant -1640531527 : i32
    %26 = vector.broadcast %c-1640531527_i32_4 : i32 to vector<16x128xi32>
    %27 = arith.addi %25, %26 : vector<16x128xi32>
    %c16_i32_5 = arith.constant 16 : i32
    %28 = vector.broadcast %c16_i32_5 : i32 to vector<16x128xi32>
    %29 = arith.shrui %27, %28 : vector<16x128xi32>
    %30 = arith.xori %27, %29 : vector<16x128xi32>
    %c2146121005_i32_6 = arith.constant 2146121005 : i32
    %31 = vector.broadcast %c2146121005_i32_6 : i32 to vector<16x128xi32>
    %32 = arith.muli %30, %31 : vector<16x128xi32>
    %c15_i32_7 = arith.constant 15 : i32
    %33 = vector.broadcast %c15_i32_7 : i32 to vector<16x128xi32>
    %34 = arith.shrui %32, %33 : vector<16x128xi32>
    %35 = arith.xori %32, %34 : vector<16x128xi32>
    %c-2073254261_i32_8 = arith.constant -2073254261 : i32
    %36 = vector.broadcast %c-2073254261_i32_8 : i32 to vector<16x128xi32>
    %37 = arith.muli %35, %36 : vector<16x128xi32>
    %c16_i32_9 = arith.constant 16 : i32
    %38 = vector.broadcast %c16_i32_9 : i32 to vector<16x128xi32>
    %39 = arith.shrui %37, %38 : vector<16x128xi32>
    %40 = arith.xori %37, %39 : vector<16x128xi32>
    %c8_i32 = arith.constant 8 : i32
    %41 = vector.broadcast %c8_i32 : i32 to vector<16x128xi32>
    %42 = arith.shrui %40, %41 : vector<16x128xi32>
    %43 = arith.sitofp %42 : vector<16x128xi32> to vector<16x128xf32>
    %cst = arith.constant 5.000000e-01 : f32
    %44 = vector.broadcast %cst : f32 to vector<16x128xf32>
    %45 = arith.addf %43, %44 : vector<16x128xf32>
    %cst_10 = arith.constant 5.96046448E-8 : f32
    %46 = vector.broadcast %cst_10 : f32 to vector<16x128xf32>
    %47 = arith.mulf %45, %46 : vector<16x128xf32>
    %cst_11 = arith.constant 5.000000e-01 : f32
    %48 = vector.broadcast %cst_11 : f32 to vector<16x128xf32>
    %49 = arith.subf %47, %48 : vector<16x128xf32>
    %50 = arith.mulf %49, %49 : vector<16x128xf32>
    %cst_12 = arith.constant -39.6968307 : f32
    %51 = vector.broadcast %cst_12 : f32 to vector<16x128xf32>
    %52 = arith.mulf %51, %50 : vector<16x128xf32>
    %cst_13 = arith.constant 220.946106 : f32
    %53 = vector.broadcast %cst_13 : f32 to vector<16x128xf32>
    %54 = arith.addf %52, %53 : vector<16x128xf32>
    %55 = arith.mulf %54, %50 : vector<16x128xf32>
    %cst_14 = arith.constant -275.928497 : f32
    %56 = vector.broadcast %cst_14 : f32 to vector<16x128xf32>
    %57 = arith.addf %55, %56 : vector<16x128xf32>
    %58 = arith.mulf %57, %50 : vector<16x128xf32>
    %cst_15 = arith.constant 138.357758 : f32
    %59 = vector.broadcast %cst_15 : f32 to vector<16x128xf32>
    %60 = arith.addf %58, %59 : vector<16x128xf32>
    %61 = arith.mulf %60, %50 : vector<16x128xf32>
    %cst_16 = arith.constant -30.6647987 : f32
    %62 = vector.broadcast %cst_16 : f32 to vector<16x128xf32>
    %63 = arith.addf %61, %62 : vector<16x128xf32>
    %64 = arith.mulf %63, %50 : vector<16x128xf32>
    %cst_17 = arith.constant 2.50662827 : f32
    %65 = vector.broadcast %cst_17 : f32 to vector<16x128xf32>
    %66 = arith.addf %64, %65 : vector<16x128xf32>
    %67 = arith.mulf %66, %49 : vector<16x128xf32>
    %cst_18 = arith.constant -54.4760971 : f32
    %68 = vector.broadcast %cst_18 : f32 to vector<16x128xf32>
    %69 = arith.mulf %68, %50 : vector<16x128xf32>
    %cst_19 = arith.constant 161.585831 : f32
    %70 = vector.broadcast %cst_19 : f32 to vector<16x128xf32>
    %71 = arith.addf %69, %70 : vector<16x128xf32>
    %72 = arith.mulf %71, %50 : vector<16x128xf32>
    %cst_20 = arith.constant -155.698975 : f32
    %73 = vector.broadcast %cst_20 : f32 to vector<16x128xf32>
    %74 = arith.addf %72, %73 : vector<16x128xf32>
    %75 = arith.mulf %74, %50 : vector<16x128xf32>
    %cst_21 = arith.constant 66.8013153 : f32
    %76 = vector.broadcast %cst_21 : f32 to vector<16x128xf32>
    %77 = arith.addf %75, %76 : vector<16x128xf32>
    %78 = arith.mulf %77, %50 : vector<16x128xf32>
    %cst_22 = arith.constant -13.2806816 : f32
    %79 = vector.broadcast %cst_22 : f32 to vector<16x128xf32>
    %80 = arith.addf %78, %79 : vector<16x128xf32>
    %81 = arith.mulf %80, %50 : vector<16x128xf32>
    %cst_23 = arith.constant 1.000000e+00 : f32
    %82 = vector.broadcast %cst_23 : f32 to vector<16x128xf32>
    %83 = arith.addf %81, %82 : vector<16x128xf32>
    %84 = arith.divf %67, %83 : vector<16x128xf32>
    %cst_24 = arith.constant 2.425000e-02 : f32
    %85 = vector.broadcast %cst_24 : f32 to vector<16x128xf32>
    %86 = arith.minimumf %47, %85 : vector<16x128xf32>
    %87 = math.log %86 : vector<16x128xf32>
    %cst_25 = arith.constant -2.000000e+00 : f32
    %88 = vector.broadcast %cst_25 : f32 to vector<16x128xf32>
    %89 = arith.mulf %88, %87 : vector<16x128xf32>
    %90 = math.sqrt %89 : vector<16x128xf32>
    %cst_26 = arith.constant -0.0077848942 : f32
    %91 = vector.broadcast %cst_26 : f32 to vector<16x128xf32>
    %92 = arith.mulf %91, %90 : vector<16x128xf32>
    %cst_27 = arith.constant -0.322396457 : f32
    %93 = vector.broadcast %cst_27 : f32 to vector<16x128xf32>
    %94 = arith.addf %92, %93 : vector<16x128xf32>
    %95 = arith.mulf %94, %90 : vector<16x128xf32>
    %cst_28 = arith.constant -2.40075827 : f32
    %96 = vector.broadcast %cst_28 : f32 to vector<16x128xf32>
    %97 = arith.addf %95, %96 : vector<16x128xf32>
    %98 = arith.mulf %97, %90 : vector<16x128xf32>
    %cst_29 = arith.constant -2.54973245 : f32
    %99 = vector.broadcast %cst_29 : f32 to vector<16x128xf32>
    %100 = arith.addf %98, %99 : vector<16x128xf32>
    %101 = arith.mulf %100, %90 : vector<16x128xf32>
    %cst_30 = arith.constant 4.37466431 : f32
    %102 = vector.broadcast %cst_30 : f32 to vector<16x128xf32>
    %103 = arith.addf %101, %102 : vector<16x128xf32>
    %104 = arith.mulf %103, %90 : vector<16x128xf32>
    %cst_31 = arith.constant 2.938164 : f32
    %105 = vector.broadcast %cst_31 : f32 to vector<16x128xf32>
    %106 = arith.addf %104, %105 : vector<16x128xf32>
    %cst_32 = arith.constant 0.00778469583 : f32
    %107 = vector.broadcast %cst_32 : f32 to vector<16x128xf32>
    %108 = arith.mulf %107, %90 : vector<16x128xf32>
    %cst_33 = arith.constant 0.322467119 : f32
    %109 = vector.broadcast %cst_33 : f32 to vector<16x128xf32>
    %110 = arith.addf %108, %109 : vector<16x128xf32>
    %111 = arith.mulf %110, %90 : vector<16x128xf32>
    %cst_34 = arith.constant 2.44513416 : f32
    %112 = vector.broadcast %cst_34 : f32 to vector<16x128xf32>
    %113 = arith.addf %111, %112 : vector<16x128xf32>
    %114 = arith.mulf %113, %90 : vector<16x128xf32>
    %cst_35 = arith.constant 3.7544086 : f32
    %115 = vector.broadcast %cst_35 : f32 to vector<16x128xf32>
    %116 = arith.addf %114, %115 : vector<16x128xf32>
    %117 = arith.mulf %116, %90 : vector<16x128xf32>
    %cst_36 = arith.constant 1.000000e+00 : f32
    %118 = vector.broadcast %cst_36 : f32 to vector<16x128xf32>
    %119 = arith.addf %117, %118 : vector<16x128xf32>
    %120 = arith.divf %106, %119 : vector<16x128xf32>
    %cst_37 = arith.constant 1.000000e+00 : f32
    %121 = vector.broadcast %cst_37 : f32 to vector<16x128xf32>
    %122 = arith.subf %121, %47 : vector<16x128xf32>
    %cst_38 = arith.constant 2.425000e-02 : f32
    %123 = vector.broadcast %cst_38 : f32 to vector<16x128xf32>
    %124 = arith.minimumf %122, %123 : vector<16x128xf32>
    %125 = math.log %124 : vector<16x128xf32>
    %cst_39 = arith.constant -2.000000e+00 : f32
    %126 = vector.broadcast %cst_39 : f32 to vector<16x128xf32>
    %127 = arith.mulf %126, %125 : vector<16x128xf32>
    %128 = math.sqrt %127 : vector<16x128xf32>
    %cst_40 = arith.constant -0.0077848942 : f32
    %129 = vector.broadcast %cst_40 : f32 to vector<16x128xf32>
    %130 = arith.mulf %129, %128 : vector<16x128xf32>
    %cst_41 = arith.constant -0.322396457 : f32
    %131 = vector.broadcast %cst_41 : f32 to vector<16x128xf32>
    %132 = arith.addf %130, %131 : vector<16x128xf32>
    %133 = arith.mulf %132, %128 : vector<16x128xf32>
    %cst_42 = arith.constant -2.40075827 : f32
    %134 = vector.broadcast %cst_42 : f32 to vector<16x128xf32>
    %135 = arith.addf %133, %134 : vector<16x128xf32>
    %136 = arith.mulf %135, %128 : vector<16x128xf32>
    %cst_43 = arith.constant -2.54973245 : f32
    %137 = vector.broadcast %cst_43 : f32 to vector<16x128xf32>
    %138 = arith.addf %136, %137 : vector<16x128xf32>
    %139 = arith.mulf %138, %128 : vector<16x128xf32>
    %cst_44 = arith.constant 4.37466431 : f32
    %140 = vector.broadcast %cst_44 : f32 to vector<16x128xf32>
    %141 = arith.addf %139, %140 : vector<16x128xf32>
    %142 = arith.mulf %141, %128 : vector<16x128xf32>
    %cst_45 = arith.constant 2.938164 : f32
    %143 = vector.broadcast %cst_45 : f32 to vector<16x128xf32>
    %144 = arith.addf %142, %143 : vector<16x128xf32>
    %cst_46 = arith.constant 0.000000e+00 : f32
    %145 = vector.broadcast %cst_46 : f32 to vector<16x128xf32>
    %146 = arith.subf %145, %144 : vector<16x128xf32>
    %cst_47 = arith.constant 0.00778469583 : f32
    %147 = vector.broadcast %cst_47 : f32 to vector<16x128xf32>
    %148 = arith.mulf %147, %128 : vector<16x128xf32>
    %cst_48 = arith.constant 0.322467119 : f32
    %149 = vector.broadcast %cst_48 : f32 to vector<16x128xf32>
    %150 = arith.addf %148, %149 : vector<16x128xf32>
    %151 = arith.mulf %150, %128 : vector<16x128xf32>
    %cst_49 = arith.constant 2.44513416 : f32
    %152 = vector.broadcast %cst_49 : f32 to vector<16x128xf32>
    %153 = arith.addf %151, %152 : vector<16x128xf32>
    %154 = arith.mulf %153, %128 : vector<16x128xf32>
    %cst_50 = arith.constant 3.7544086 : f32
    %155 = vector.broadcast %cst_50 : f32 to vector<16x128xf32>
    %156 = arith.addf %154, %155 : vector<16x128xf32>
    %157 = arith.mulf %156, %128 : vector<16x128xf32>
    %cst_51 = arith.constant 1.000000e+00 : f32
    %158 = vector.broadcast %cst_51 : f32 to vector<16x128xf32>
    %159 = arith.addf %157, %158 : vector<16x128xf32>
    %160 = arith.divf %146, %159 : vector<16x128xf32>
    %cst_52 = arith.constant 2.425000e-02 : f32
    %161 = vector.broadcast %cst_52 : f32 to vector<16x128xf32>
    %162 = arith.cmpf olt, %47, %161 : vector<16x128xf32>
    %163 = arith.select %162, %120, %84 : vector<16x128xi1>, vector<16x128xf32>
    %cst_53 = arith.constant 9.757500e-01 : f32
    %164 = vector.broadcast %cst_53 : f32 to vector<16x128xf32>
    %165 = arith.cmpf ogt, %47, %164 : vector<16x128xf32>
    %166 = arith.select %165, %160, %163 : vector<16x128xi1>, vector<16x128xf32>
    %cst_54 = arith.constant 1.000000e-01 : f32
    %167 = vector.broadcast %cst_54 : f32 to vector<16x128xf32>
    %168 = arith.mulf %167, %166 : vector<16x128xf32>
    %cst_55 = arith.constant 1.000000e+00 : f32
    %169 = vector.broadcast %cst_55 : f32 to vector<16x128xf32>
    %170 = arith.addf %169, %168 : vector<16x128xf32>
    %171 = arith.mulf %0, %170 : vector<16x128xf32>
    %c0_56 = arith.constant 0 : index
    %c0_57 = arith.constant 0 : index
    %172 = vector.load %arg3[%c0_56, %c0_57] : memref<16x128xf32, #tpu.memory_space<vmem>>, vector<16x128xf32>
    tpu.vector_store %arg3[%c0_56, %c0_57], %171 {strides = array<i32>} : memref<16x128xf32, #tpu.memory_space<vmem>>, vector<16x128xf32>,
    return
  }
  func.func @transform_0(%arg0: i32) -> i32 {
    %c0_i32 = arith.constant 0 : i32
    %c0_i32_0 = arith.constant 0 : i32
    return %c0_i32 : i32
  }
  func.func @transform_1(%arg0: i32) -> (i32, i32) {
    %c0_i32 = arith.constant 0 : i32
    %c0_i32_0 = arith.constant 0 : i32
    return %arg0, %c0_i32 : i32, i32
  }
  func.func @transform_2(%arg0: i32) -> (i32, i32) {
    %c0_i32 = arith.constant 0 : i32
    %c0_i32_0 = arith.constant 0 : i32
    return %arg0, %c0_i32 : i32, i32
  }
}

</mosaic_0001>

<llo_original>
// kernel: tpu_custom_call.1
$region0: #{tpu_custom_call.1}
  #allocation0 [shape = 'u32[]', space=smem, size = 0x4, offset = 0x4, fixed_abs, tag = 'smem constant byte address 0x4 - core index']
  #allocation1 [shape = 'u32[144,128]{1,0:T(1,128)}', space=vmem, size = 0x12000, scoped, tag = 'internal scratch']
  #allocation2 [shape = 's32[1]{0:T(128)S(6)}', space=smem, size = 0x200, scoped, tag = 'scoped memory for tpu_custom_call.1']
  %s0 = inlined_call_operand.<no memory space> [shape: s32[1], index: 0, kind: input, shape index: {}]
  %s1 = inlined_call_operand.hbm [shape: f32[16,128], index: 1, kind: input, shape index: {}, may-alias: {1,2}]
  %s2 = inlined_call_operand.hbm [shape: f32[16,128], index: 2, kind: output, shape index: {}, may-alias: {1,2}]
  %s3 = sld [smem:[#allocation0]]
  $region22: #{tpu_custom_call.1} parent=0
    _
  %s5 = ssub.s32 1, %s3
  %s6 = scalar_select 0, %s5, %s3
  %7 = sst [smem:[#allocation2]] %s0
  $region1: #{tpu_custom_call.1} parent=0
    #allocation3 [shape = 'u8[8192]{0}', space=vmem, size = 0x2000, scoped, tag = 'input window, operand 1, single buffered']
    #allocation4 [shape = 's32[1]{0}', space=sflag, size = 0x4, scoped, tag = 'scoped memory for tpu_custom_call.1']
    #allocation5 [shape = 's32[1]{0}', space=sflag, size = 0x4, scoped, tag = 'scoped memory for tpu_custom_call.1']
    #allocation6 [shape = 'u8[8192]{0}', space=vmem, size = 0x2000, scoped, tag = 'output window, operand 0, single buffered']
    %8 = vsyncpa [#allocation4], 0
    %9 = vsyncpa [#allocation5], 0
    // Predicated region
    $region2: #{tpu_custom_call.1} parent=1 // pred_check
      _
    $region3: #{tpu_custom_call.1} parent=1 // pred_check_branch
      %11 = sbr.rel (0) target = $region5
    $region4: #{tpu_custom_call.1} parent=1 // pred_region
      _
    $region5: #{tpu_custom_call.1} parent=1 // pred_fallthru
      _
    // Predicated region
    $region6: #{tpu_custom_call.1} parent=1 // pred_check
      _
    $region7: #{tpu_custom_call.1} parent=1 // pred_check_branch
      %13 = sbr.rel (0) target = $region9
    $region8: #{tpu_custom_call.1} parent=1 // pred_region
      %s15 = ssub.s32 256, 256
      %16 = vsyncadd [#allocation4], %s15
      %s17 = sshll.u32 [#allocation3], 4
      %s18 = int_to_ptr.vmem [resolvable:$true] %s17
      %23 = dma.hbm_to_vmem [thread:$0]  %s1, 256, %s18, [#allocation4], 128, 128, 8
    $region9: #{tpu_custom_call.1} parent=1 // pred_fallthru
      _
    // Predicated region
    $region10: #{tpu_custom_call.1} parent=1 // pred_check
      _
    $region11: #{tpu_custom_call.1} parent=1 // pred_check_branch
      %25 = sbr.rel (0) target = $region13
    $region12: #{tpu_custom_call.1} parent=1 // pred_region
      %26 = dma.done [#allocation4], 256
    $region13: #{tpu_custom_call.1} parent=1 // pred_fallthru
      _
    %v27 = vld [vmem:[#allocation3] sm:$0xff]
    %v28 = vld [vmem:[#allocation3 + $0x8] sm:$0xff]
    %v29 = vlaneseq
    %v30 = vshrl.u32 %v29, 7
    %v31 = vadd.s32 %v30, 8
    %v32 = vlaneseq
    %v33 = vand.u32 %v32, 127
    %s34 = smul.u32 0, 16
    %v35 = vstv %s34
    %v36 = vadd.s32 %v35, %v30
    %v37 = vadd.s32 %v35, %v31
    %v38 = vmul.u32 %v36, 128
    %v39 = vmul.u32 %v37, 128
    %v40 = vadd.s32 %v38, %v33
    %v41 = vadd.s32 %v39, %v33
    %s42 = sld [smem:[#allocation2]]
    %s43 = smul.u32 %s42, 2654435769
    %v44 = vstv %s43
    %v45 = vxor.u32 %v40, %v44
    %v46 = vxor.u32 %v41, %v44
    %v47 = vshrl.u32 %v45, 16
    %v48 = vshrl.u32 %v46, 16
    %v49 = vxor.u32 %v45, %v47
    %v50 = vxor.u32 %v46, %v48
    %v51 = vmul.u32 %v49, 2146121005
    %v52 = vmul.u32 %v50, 2146121005
    %v53 = vshrl.u32 %v51, 15
    %v54 = vshrl.u32 %v52, 15
    %v55 = vxor.u32 %v51, %v53
    %v56 = vxor.u32 %v52, %v54
    %v57 = vmul.u32 %v55, 2221713035
    %v58 = vmul.u32 %v56, 2221713035
    %v59 = vshrl.u32 %v57, 16
    %v60 = vshrl.u32 %v58, 16
    %v61 = vxor.u32 %v57, %v59
    %v62 = vxor.u32 %v58, %v60
    %v63 = vadd.s32 %v61, 2654435769
    %v64 = vadd.s32 %v62, 2654435769
    %v65 = vshrl.u32 %v63, 16
    %v66 = vshrl.u32 %v64, 16
    %v67 = vxor.u32 %v63, %v65
    %v68 = vxor.u32 %v64, %v66
    %v69 = vmul.u32 %v67, 2146121005
    %v70 = vmul.u32 %v68, 2146121005
    %v71 = vshrl.u32 %v69, 15
    %v72 = vshrl.u32 %v70, 15
    %v73 = vxor.u32 %v69, %v71
    %v74 = vxor.u32 %v70, %v72
    %v75 = vmul.u32 %v73, 2221713035
    %v76 = vmul.u32 %v74, 2221713035
    %v77 = vshrl.u32 %v75, 16
    %v78 = vshrl.u32 %v76, 16
    %v79 = vxor.u32 %v75, %v77
    %v80 = vxor.u32 %v76, %v78
    %v81 = vshrl.u32 %v79, 8
    %v82 = vshrl.u32 %v80, 8
    %v83 = vcvt.s32.f32 %v81
    %v84 = vcvt.s32.f32 %v82
    %v85 = vadd.f32 %v83, 0.5
    %v86 = vadd.f32 %v84, 0.5
    %v87 = vmul.f32 %v85, 5.9604645e-08
    %v88 = vmul.f32 %v86, 5.9604645e-08
    %v89 = vsub.f32 %v87, 0.5
    %v90 = vsub.f32 %v88, 0.5
    %v91 = vmul.f32 %v89, %v89
    %v92 = vmul.f32 %v90, %v90
    %v93 = vmul.f32 %v91, -39.69683
    %v94 = vmul.f32 %v92, -39.69683
    %v95 = vadd.f32 %v93, 220.9461
    %v96 = vadd.f32 %v94, 220.9461
    %v97 = vmul.f32 %v95, %v91
    %v98 = vmul.f32 %v96, %v92
    %v99 = vadd.f32 %v97, -275.9285
    %v100 = vadd.f32 %v98, -275.9285
    %v101 = vmul.f32 %v99, %v91
    %v102 = vmul.f32 %v100, %v92
    %v103 = vadd.f32 %v101, 138.35776
    %v104 = vadd.f32 %v102, 138.35776
    %v105 = vmul.f32 %v103, %v91
    %v106 = vmul.f32 %v104, %v92
    %v107 = vadd.f32 %v105, -30.664799
    %v108 = vadd.f32 %v106, -30.664799
    %v109 = vmul.f32 %v107, %v91
    %v110 = vmul.f32 %v108, %v92
    %v111 = vadd.f32 %v109, 2.5066283
    %v112 = vadd.f32 %v110, 2.5066283
    %v113 = vmul.f32 %v111, %v89
    %v114 = vmul.f32 %v112, %v90
    %v115 = vmul.f32 %v91, -54.476097
    %v116 = vmul.f32 %v92, -54.476097
    %v117 = vadd.f32 %v115, 161.58583
    %v118 = vadd.f32 %v116, 161.58583
    %v119 = vmul.f32 %v117, %v91
    %v120 = vmul.f32 %v118, %v92
    %v121 = vadd.f32 %v119, -155.69897
    %v122 = vadd.f32 %v120, -155.69897
    %v123 = vmul.f32 %v121, %v91
    %v124 = vmul.f32 %v122, %v92
    %v125 = vadd.f32 %v123, 66.801315
    %v126 = vadd.f32 %v124, 66.801315
    %v127 = vmul.f32 %v125, %v91
    %v128 = vmul.f32 %v126, %v92
    %v129 = vadd.f32 %v127, -13.280682
    %v130 = vadd.f32 %v128, -13.280682
    %v131 = vmul.f32 %v129, %v91
    %v132 = vmul.f32 %v130, %v92
    %v133 = vadd.f32 %v131, 1.0
    %v134 = vadd.f32 %v132, 1.0
    %v135 = vrcp.pop %v133
    %v136 = vmul.f32 %v113, %v135
    %v137 = vrcp.pop %v134
    %v138 = vmul.f32 %v114, %v137
    %v139 = vmin.f32 %v87, 0.02425
    %v140 = vmin.f32 %v88, 0.02425
    %v141 = vlog2.pop %v139
    %v142 = vmul.f32 %v141, 0.6931472
    %v143 = vlog2.pop %v140
    %v144 = vmul.f32 %v143, 0.6931472
    %v145 = vmul.f32 %v142, -2.0
    %v146 = vmul.f32 %v144, -2.0
    %v147 = vrsqrt.pop %v145
    %v148 = vmul.f32 %v145, %v147
    %vm149 = vcmp.eq.f32.partialorder %v145, inf
    %v150 = vsel %vm149, %v145, %v148
    %vm151 = vcmp.eq.f32.partialorder %v145, 0.0
    %v152 = vand.u32 %v145, 2147483648
    %v153 = vsel %vm151, %v152, %v150
    %v154 = vrsqrt.pop %v146
    %v155 = vmul.f32 %v146, %v154
    %vm156 = vcmp.eq.f32.partialorder %v146, inf
    %v157 = vsel %vm156, %v146, %v155
    %vm158 = vcmp.eq.f32.partialorder %v146, 0.0
    %v159 = vand.u32 %v146, 2147483648
    %v160 = vsel %vm158, %v159, %v157
    %v161 = vmul.f32 %v153, -0.007784894
    %v162 = vmul.f32 %v160, -0.007784894
    %v163 = vadd.f32 %v161, -0.32239646
    %v164 = vadd.f32 %v162, -0.32239646
    %v165 = vmul.f32 %v163, %v153
    %v166 = vmul.f32 %v164, %v160
    %v167 = vadd.f32 %v165, -2.4007583
    %v168 = vadd.f32 %v166, -2.4007583
    %v169 = vmul.f32 %v167, %v153
    %v170 = vmul.f32 %v168, %v160
    %v171 = vadd.f32 %v169, -2.5497324
    %v172 = vadd.f32 %v170, -2.5497324
    %v173 = vmul.f32 %v171, %v153
    %v174 = vmul.f32 %v172, %v160
    %v175 = vadd.f32 %v173, 4.3746643
    %v176 = vadd.f32 %v174, 4.3746643
    %v177 = vmul.f32 %v175, %v153
    %v178 = vmul.f32 %v176, %v160
    %v179 = vadd.f32 %v177, 2.938164
    %v180 = vadd.f32 %v178, 2.938164
    %v181 = vmul.f32 %v153, 0.007784696
    %v182 = vmul.f32 %v160, 0.007784696
    %v183 = vadd.f32 %v181, 0.32246712
    %v184 = vadd.f32 %v182, 0.32246712
    %v185 = vmul.f32 %v183, %v153
    %v186 = vmul.f32 %v184, %v160
    %v187 = vadd.f32 %v185, 2.4451342
    %v188 = vadd.f32 %v186, 2.4451342
    %v189 = vmul.f32 %v187, %v153
    %v190 = vmul.f32 %v188, %v160
    %v191 = vadd.f32 %v189, 3.7544086
    %v192 = vadd.f32 %v190, 3.7544086
    %v193 = vmul.f32 %v191, %v153
    %v194 = vmul.f32 %v192, %v160
    %v195 = vadd.f32 %v193, 1.0
    %v196 = vadd.f32 %v194, 1.0
    %v197 = vrcp.pop %v195
    %v198 = vmul.f32 %v179, %v197
    %v199 = vrcp.pop %v196
    %v200 = vmul.f32 %v180, %v199
    %v201 = vsub.f32 1.0, %v87
    %v202 = vsub.f32 1.0, %v88
    %v203 = vmin.f32 %v201, 0.02425
    %v204 = vmin.f32 %v202, 0.02425
    %v205 = vlog2.pop %v203
    %v206 = vmul.f32 %v205, 0.6931472
    %v207 = vlog2.pop %v204
    %v208 = vmul.f32 %v207, 0.6931472
    %v209 = vmul.f32 %v206, -2.0
    %v210 = vmul.f32 %v208, -2.0
    %v211 = vrsqrt.pop %v209
    %v212 = vmul.f32 %v209, %v211
    %vm213 = vcmp.eq.f32.partialorder %v209, inf
    %v214 = vsel %vm213, %v209, %v212
    %vm215 = vcmp.eq.f32.partialorder %v209, 0.0
    %v216 = vand.u32 %v209, 2147483648
    %v217 = vsel %vm215, %v216, %v214
    %v218 = vrsqrt.pop %v210
    %v219 = vmul.f32 %v210, %v218
    %vm220 = vcmp.eq.f32.partialorder %v210, inf
    %v221 = vsel %vm220, %v210, %v219
    %vm222 = vcmp.eq.f32.partialorder %v210, 0.0
    %v223 = vand.u32 %v210, 2147483648
    %v224 = vsel %vm222, %v223, %v221
    %v225 = vmul.f32 %v217, -0.007784894
    %v226 = vmul.f32 %v224, -0.007784894
    %v227 = vadd.f32 %v225, -0.32239646
    %v228 = vadd.f32 %v226, -0.32239646
    %v229 = vmul.f32 %v227, %v217
    %v230 = vmul.f32 %v228, %v224
    %v231 = vadd.f32 %v229, -2.4007583
    %v232 = vadd.f32 %v230, -2.4007583
    %v233 = vmul.f32 %v231, %v217
    %v234 = vmul.f32 %v232, %v224
    %v235 = vadd.f32 %v233, -2.5497324
    %v236 = vadd.f32 %v234, -2.5497324
    %v237 = vmul.f32 %v235, %v217
    %v238 = vmul.f32 %v236, %v224
    %v239 = vadd.f32 %v237, 4.3746643
    %v240 = vadd.f32 %v238, 4.3746643
    %v241 = vmul.f32 %v239, %v217
    %v242 = vmul.f32 %v240, %v224
    %v243 = vadd.f32 %v241, 2.938164
    %v244 = vadd.f32 %v242, 2.938164
    %v245 = vsub.f32 0.0, %v243
    %v246 = vsub.f32 0.0, %v244
    %v247 = vmul.f32 %v217, 0.007784696
    %v248 = vmul.f32 %v224, 0.007784696
    %v249 = vadd.f32 %v247, 0.32246712
    %v250 = vadd.f32 %v248, 0.32246712
    %v251 = vmul.f32 %v249, %v217
    %v252 = vmul.f32 %v250, %v224
    %v253 = vadd.f32 %v251, 2.4451342
    %v254 = vadd.f32 %v252, 2.4451342
    %v255 = vmul.f32 %v253, %v217
    %v256 = vmul.f32 %v254, %v224
    %v257 = vadd.f32 %v255, 3.7544086
    %v258 = vadd.f32 %v256, 3.7544086
    %v259 = vmul.f32 %v257, %v217
    %v260 = vmul.f32 %v258, %v224
    %v261 = vadd.f32 %v259, 1.0
    %v262 = vadd.f32 %v260, 1.0
    %v263 = vrcp.pop %v261
    %v264 = vmul.f32 %v245, %v263
    %v265 = vrcp.pop %v262
    %v266 = vmul.f32 %v246, %v265
    %vm267 = vcmp.lt.f32.partialorder %v87, 0.02425
    %vm268 = vcmp.lt.f32.partialorder %v88, 0.02425
    %v269 = vsel %vm267, %v198, %v136
    %v270 = vsel %vm268, %v200, %v138
    %vm271 = vcmp.gt.f32.partialorder %v87, 0.97575
    %vm272 = vcmp.gt.f32.partialorder %v88, 0.97575
    %v273 = vsel %vm271, %v264, %v269
    %v274 = vsel %vm272, %v266, %v270
    %v275 = vmul.f32 %v273, 0.1
    %v276 = vmul.f32 %v274, 0.1
    %v277 = vadd.f32 %v275, 1.0
    %v278 = vadd.f32 %v276, 1.0
    %v279 = vmul.f32 %v27, %v277
    %v280 = vmul.f32 %v28, %v278
    %281 = vst [vmem:[#allocation6] sm:$0xff] %v279
    %282 = vst [vmem:[#allocation6 + $0x8] sm:$0xff] %v280
    // Predicated region
    $region14: #{tpu_custom_call.1} parent=1 // pred_check
      _
    $region15: #{tpu_custom_call.1} parent=1 // pred_check_branch
      %284 = sbr.rel (0) target = $region17
    $region16: #{tpu_custom_call.1} parent=1 // pred_region
      %s286 = ssub.s32 256, 256
      %287 = vsyncadd [#allocation5], %s286
      %s288 = sshll.u32 [#allocation6], 4
      %s289 = int_to_ptr.vmem [resolvable:$true] %s288
      %294 = dma.vmem_to_hbm [thread:$0]  %s289, 256, %s2, [#allocation5], 128, 128, 8
    $region17: #{tpu_custom_call.1} parent=1 // pred_fallthru
      _
    // Predicated region
    $region18: #{tpu_custom_call.1} parent=1 // pred_check
      _
    $region19: #{tpu_custom_call.1} parent=1 // pred_check_branch
      %296 = sbr.rel (0) target = $region21
    $region20: #{tpu_custom_call.1} parent=1 // pred_region
      %297 = dma.done [#allocation5], 256
    $region21: #{tpu_custom_call.1} parent=1 // pred_fallthru
      _
    %298 = vsyncpa [#allocation4], 1
    %299 = vsyncpa [#allocation5], 1

</llo_original>
